<compile_context>
chip_gen: v7x
topology: tpu7x:2x2x1
jax: 0.10.0
libtpu: 0.0.40
codegen_flags: <defaults>
</compile_context>

<pallas_src>
import functools

import jax
import jax.numpy as jnp
from jax.experimental import pallas as pl
from jax.experimental.pallas import tpu as pltpu


_LANE = 128


def _round_up(x, m):
    return ((x + m - 1) // m) * m


def _pad2(x, rows, cols):
    r, c = x.shape
    return jnp.pad(x, ((0, rows - r), (0, cols - c)))


def _hw_config():
    """Generation-aware tiling / scoped-VMEM limits."""
    vmem_cap = None
    try:
        info = pltpu.get_tpu_info()
        vmem_cap = getattr(info, "vmem_capacity_bytes", None)
    except Exception:
        vmem_cap = None
    if vmem_cap is not None and vmem_cap >= 100 * 1024 * 1024:
        # v5e / v6e: 128 MiB VMEM -> bigger row tiles, higher scoped limit.
        return {"tile_m": 512, "tile_k": 1024, "vmem_limit": 100 * 1024 * 1024}
    # v7x (64 MiB physical) or unknown: conservative config.
    return {"tile_m": 256, "tile_k": 512, "vmem_limit": 48 * 1024 * 1024}


# -----------------------------------------------------------------------------
# Kernel 1: fused feature transform  XW1_scaled = D^-1/2 * (X @ W1)
#   (both graph branches concatenated along rows; grid over row tiles)
# -----------------------------------------------------------------------------
def _feature_transform_kernel(x_ref, w_ref, dinv_ref, o_ref):
    xw = jnp.dot(x_ref[...], w_ref[...], preferred_element_type=jnp.float32)
    o_ref[...] = (xw * dinv_ref[...]).astype(o_ref.dtype)


def _feature_transform(x, w, dinv, tile_m, vmem_limit):
    n, fin = x.shape
    fout = w.shape[1]
    return pl.pallas_call(
        _feature_transform_kernel,
        out_shape=jax.ShapeDtypeStruct((n, fout), jnp.bfloat16),
        grid=(n // tile_m,),
        in_specs=[
            pl.BlockSpec((tile_m, fin), lambda i: (i, 0)),   # X row tile (bf16)
            pl.BlockSpec((fin, fout), lambda i: (0, 0)),     # W1 resident (bf16)
            pl.BlockSpec((tile_m, 1), lambda i: (i, 0)),     # D^-1/2 rows (f32)
        ],
        out_specs=pl.BlockSpec((tile_m, fout), lambda i: (i, 0)),
        compiler_params=pltpu.CompilerParams(
            dimension_semantics=("parallel",),
            vmem_limit_bytes=vmem_limit),
    )(x, w, dinv)


# -----------------------------------------------------------------------------
# Kernel 2: layer-1 aggregation (K-tiled) + fused relu + fused layer-2 transform
#   HW2_scaled_tile = D^-1/2 * (relu((A_tile @ XW1_scaled) * D^-1/2 + b1) @ W2)
# -----------------------------------------------------------------------------
def _gcn1_fused_kernel(a_ref, xw_ref, dinv_ref, b1_ref, w2_ref, o_ref, acc_ref):
    k = pl.program_id(1)

    @pl.when(k == 0)
    def _():
        acc_ref[...] = jnp.zeros_like(acc_ref)

    a = a_ref[...].astype(jnp.float32).astype(jnp.bfloat16)   # int8 -> bf16 (VPU)
    acc_ref[...] += jnp.dot(a, xw_ref[...], preferred_element_type=jnp.float32)

    @pl.when(k == pl.num_programs(1) - 1)
    def _():
        dinv = dinv_ref[...]
        h1 = jnp.maximum(acc_ref[...] * dinv + b1_ref[...], 0.0)
        hw2 = jnp.dot(h1.astype(jnp.bfloat16), w2_ref[...],
                      preferred_element_type=jnp.float32)
        o_ref[...] = (hw2 * dinv).astype(o_ref.dtype)


def _gcn_layer1_fused(a, xw1s, dinv, b1, w2, tile_m, tile_k, vmem_limit):
    n = a.shape[0]
    fh = xw1s.shape[1]
    fo = w2.shape[1]
    cost = pl.CostEstimate(
        flops=2 * n * n * fh + 2 * n * fh * fo,
        transcendentals=0,
        bytes_accessed=n * n + 2 * n * fh + 2 * n * fo + 2 * fh * fo)
    return pl.pallas_call(
        _gcn1_fused_kernel,
        out_shape=jax.ShapeDtypeStruct((n, fo), jnp.bfloat16),
        grid=(n // tile_m, n // tile_k),
        in_specs=[
            pl.BlockSpec((tile_m, tile_k), lambda i, k: (i, k)),   # A tile (int8)
            pl.BlockSpec((tile_k, fh), lambda i, k: (k, 0)),       # XW1_scaled (bf16)
            pl.BlockSpec((tile_m, 1), lambda i, k: (i, 0)),        # D^-1/2 rows (f32)
            pl.BlockSpec((1, fh), lambda i, k: (0, 0)),            # b1 (f32)
            pl.BlockSpec((fh, fo), lambda i, k: (0, 0)),           # W2 resident (bf16)
        ],
        out_specs=pl.BlockSpec((tile_m, fo), lambda i, k: (i, 0)),
        scratch_shapes=[pltpu.VMEM((tile_m, fh), jnp.float32)],
        compiler_params=pltpu.CompilerParams(
            dimension_semantics=("parallel", "arbitrary"),
            vmem_limit_bytes=vmem_limit),
        cost_estimate=cost,
    )(a, xw1s, dinv, b1, w2)


# -----------------------------------------------------------------------------
# Kernel 3: layer-2 aggregation (K-tiled) + fused L2 normalization (bf16 out)
#   E_tile = normalize((A_tile @ HW2_scaled) * D^-1/2 + b2)
# -----------------------------------------------------------------------------
def _gcn2_fused_kernel(a_ref, hw_ref, dinv_ref, b2_ref, o_ref, acc_ref):
    k = pl.program_id(1)

    @pl.when(k == 0)
    def _():
        acc_ref[...] = jnp.zeros_like(acc_ref)

    a = a_ref[...].astype(jnp.float32).astype(jnp.bfloat16)
    acc_ref[...] += jnp.dot(a, hw_ref[...], preferred_element_type=jnp.float32)

    @pl.when(k == pl.num_programs(1) - 1)
    def _():
        e = acc_ref[...] * dinv_ref[...] + b2_ref[...]
        # F.normalize(p=2, dim=1): x / max(||x||, 1e-12) == x * rsqrt(max(ss, 1e-24))
        inv_norm = jax.lax.rsqrt(
            jnp.maximum(jnp.sum(e * e, axis=1, keepdims=True), 1e-24))
        o_ref[...] = (e * inv_norm).astype(o_ref.dtype)


def _gcn_layer2_fused(a, hw2s, dinv, b2, tile_m, tile_k, vmem_limit):
    n = a.shape[0]
    fo = hw2s.shape[1]
    cost = pl.CostEstimate(
        flops=2 * n * n * fo,
        transcendentals=n,
        bytes_accessed=n * n + 2 * n * fo + 2 * n * fo)
    return pl.pallas_call(
        _gcn2_fused_kernel,
        out_shape=jax.ShapeDtypeStruct((n, fo), jnp.bfloat16),
        grid=(n // tile_m, n // tile_k),
        in_specs=[
            pl.BlockSpec((tile_m, tile_k), lambda i, k: (i, k)),   # A tile (int8)
            pl.BlockSpec((tile_k, fo), lambda i, k: (k, 0)),       # HW2_scaled (bf16)
            pl.BlockSpec((tile_m, 1), lambda i, k: (i, 0)),        # D^-1/2 rows (f32)
            pl.BlockSpec((1, fo), lambda i, k: (0, 0)),            # b2 (f32)
        ],
        out_specs=pl.BlockSpec((tile_m, fo), lambda i, k: (i, 0)),
        scratch_shapes=[pltpu.VMEM((tile_m, fo), jnp.float32)],
        compiler_params=pltpu.CompilerParams(
            dimension_semantics=("parallel", "arbitrary"),
            vmem_limit_bytes=vmem_limit),
        cost_estimate=cost,
    )(a, hw2s, dinv, b2)


# -----------------------------------------------------------------------------
# Kernel 4: row-tiled InfoNCE loss (similarity, clamp, cross entropy per row)
# -----------------------------------------------------------------------------
def _loss_rows_kernel(tg_ref, vg_ref, o_ref, *, n_tg, n_vg, inv_temp, tile_m):
    tg = tg_ref[...]                       # (tile_m, Fo) bf16, L2-normalized
    vg = vg_ref[...]                       # (Np_vg, Fo) bf16, L2-normalized

    # sim = tg @ vg.T / temperature (bf16 operands, f32 accumulation, no transpose)
    sim = jax.lax.dot_general(tg, vg, (((1,), (1,)), ((), ())),
                              preferred_element_type=jnp.float32)
    sim = jnp.clip(sim * inv_temp, -50.0, 50.0)

    row0 = pl.program_id(0) * tile_m
    row = row0 + jax.lax.broadcasted_iota(jnp.int32, sim.shape, 0)
    col = jax.lax.broadcasted_iota(jnp.int32, sim.shape, 1)

    sim = jnp.where(col < n_vg, sim, -1e30)          # mask padded vg columns
    m = jnp.max(sim, axis=1, keepdims=True)
    lse = m + jnp.log(jnp.sum(jnp.exp(sim - m), axis=1, keepdims=True))

    label_mask = col == (row % n_vg)                 # labels[i] = i % n_vg
    picked = jnp.sum(jnp.where(label_mask, sim, 0.0), axis=1, keepdims=True)

    row_valid = (row0 + jax.lax.broadcasted_iota(jnp.int32, lse.shape, 0)) < n_tg
    o_ref[...] = jnp.where(row_valid, lse - picked, 0.0)


def _contrastive_loss(e_tg, e_vg, n_tg, n_vg, temperature, tile_m, vmem_limit):
    np_tg, fo = e_tg.shape
    np_vg = e_vg.shape[0]
    kernel = functools.partial(_loss_rows_kernel, n_tg=int(n_tg), n_vg=int(n_vg),
                               inv_temp=float(1.0 / temperature), tile_m=tile_m)
    per_row = pl.pallas_call(
        kernel,
        out_shape=jax.ShapeDtypeStruct((np_tg, 1), jnp.float32),
        grid=(np_tg // tile_m,),
        in_specs=[
            pl.BlockSpec((tile_m, fo), lambda i: (i, 0)),    # tg row tile (bf16)
            pl.BlockSpec((np_vg, fo), lambda i: (0, 0)),     # vg resident (bf16)
        ],
        out_specs=pl.BlockSpec((tile_m, 1), lambda i: (i, 0)),
        compiler_params=pltpu.CompilerParams(
            dimension_semantics=("parallel",),
            vmem_limit_bytes=vmem_limit),
    )(e_tg, e_vg)
    # TODO(synk): for very large n_vg, column-tile the sim matmul with an
    # online softmax instead of keeping e_vg resident.
    return jnp.sum(per_row) * (1.0 / n_tg)


# -----------------------------------------------------------------------------
# Glue: edge_index -> padded int8 (A + I) and D^-1/2 vector (O(E) degrees)
# -----------------------------------------------------------------------------
def _build_adj(edge_index, num_nodes, num_nodes_padded):
    src = edge_index[0]
    dst = edge_index[1]
    # Dense (A + I) built directly in its storage dtype (int8: exact integer
    # edge counts up to 127 duplicates; halves the dominant HBM stream).
    a = jnp.zeros((num_nodes_padded, num_nodes_padded), dtype=jnp.int8)
    a = a.at[dst, src].add(1)                        # message flow: source -> target
    idx = jnp.arange(num_nodes)
    a = a.at[idx, idx].add(1)                        # self loops on real nodes only
    # O(E) degree computation from the edge list (no dense N^2 row-sum pass).
    deg = jax.ops.segment_sum(jnp.ones(dst.shape, jnp.float32), dst,
                              num_segments=num_nodes_padded)
    deg = deg + (jnp.arange(num_nodes_padded) < num_nodes).astype(jnp.float32)
    dinv = jnp.where(deg > 0.0, jax.lax.rsqrt(deg), 0.0)    # padded rows -> 0
    return a, dinv.reshape(-1, 1).astype(jnp.float32)


# -----------------------------------------------------------------------------
# Wrapper: full forward pass
# -----------------------------------------------------------------------------
def graph_contrastive_loss(tg_x, tg_edge_index, vg_x, vg_edge_index, params,
                           temperature=0.1, config=None):
    cfg = dict(_hw_config())
    if config:
        cfg.update(config)
    tile_m, tile_k, vmem_limit = cfg["tile_m"], cfg["tile_k"], cfg["vmem_limit"]
    pad_nodes = max(tile_m, tile_k)
    assert pad_nodes % tile_m == 0 and pad_nodes % tile_k == 0

    n_tg, in_dim = tg_x.shape
    n_vg = vg_x.shape[0]
    hid_dim = params["w1"].shape[1]
    out_dim = params["w2"].shape[1]

    np_tg = _round_up(n_tg, pad_nodes)
    np_vg = _round_up(n_vg, pad_nodes)
    fin_p = _round_up(in_dim, _LANE)
    fh_p = _round_up(hid_dim, _LANE)
    fo_p = _round_up(out_dim, _LANE)

    a_tg, dinv_tg = _build_adj(tg_edge_index, n_tg, np_tg)
    a_vg, dinv_vg = _build_adj(vg_edge_index, n_vg, np_vg)

    x_tg_p = _pad2(tg_x.astype(jnp.float32), np_tg, fin_p).astype(jnp.bfloat16)
    x_vg_p = _pad2(vg_x.astype(jnp.float32), np_vg, fin_p).astype(jnp.bfloat16)
    w1 = _pad2(params["w1"], fin_p, fh_p).astype(jnp.bfloat16)
    b1 = _pad2(params["b1"].reshape(1, -1), 1, fh_p).astype(jnp.float32)
    w2 = _pad2(params["w2"], fh_p, fo_p).astype(jnp.bfloat16)
    b2 = _pad2(params["b2"].reshape(1, -1), 1, fo_p).astype(jnp.float32)

    # Both branches use the shared tg weights -> fuse their feature transforms.
    x_cat = jnp.concatenate([x_tg_p, x_vg_p], axis=0)
    dinv_cat = jnp.concatenate([dinv_tg, dinv_vg], axis=0)

    # ---- layer-1 feature transform: XW1_scaled = D^-1/2 (X @ W1) -----------
    xw1s = _feature_transform(x_cat, w1, dinv_cat, tile_m, vmem_limit)

    # ---- layer-1 aggregation + relu + fused layer-2 transform --------------
    hw2s_tg = _gcn_layer1_fused(a_tg, xw1s[:np_tg], dinv_tg, b1, w2,
                                tile_m, tile_k, vmem_limit)
    hw2s_vg = _gcn_layer1_fused(a_vg, xw1s[np_tg:], dinv_vg, b1, w2,
                                tile_m, tile_k, vmem_limit)

    # ---- layer-2 aggregation + fused L2 normalization (bf16 embeddings) ----
    e_tg = _gcn_layer2_fused(a_tg, hw2s_tg, dinv_tg, b2, tile_m, tile_k, vmem_limit)
    e_vg = _gcn_layer2_fused(a_vg, hw2s_vg, dinv_vg, b2, tile_m, tile_k, vmem_limit)

    # ---- row-tiled InfoNCE loss --------------------------------------------
    return _contrastive_loss(e_tg, e_vg, n_tg, n_vg, temperature,
                             tile_m, vmem_limit)


def init_params(key, in_dim, hidden_dim, out_dim):
    """Deterministic synthetic init for the (used) gcn_tg1 / gcn_tg2 params."""
    k1, k2, k3, k4 = jax.random.split(key, 4)
    w1 = jax.random.normal(k1, (in_dim, hidden_dim), jnp.float32) / jnp.sqrt(in_dim)
    b1 = jax.random.normal(k2, (hidden_dim,), jnp.float32) * 0.01
    w2 = jax.random.normal(k3, (hidden_dim, out_dim), jnp.float32) / jnp.sqrt(hidden_dim)
    b2 = jax.random.normal(k4, (out_dim,), jnp.float32) * 0.01
    return {"w1": w1, "b1": b1, "w2": w2, "b2": b2}


if __name__ == "__main__":
    key = jax.random.PRNGKey(0)
    kx1, kx2, kp = jax.random.split(key, 3)

    num_nodes = 8
    in_dim, hidden_dim, out_dim = 16, 32, 16

    tg_x = jax.random.normal(kx1, (num_nodes, in_dim), jnp.float32)
    vg_x = jax.random.normal(kx2, (num_nodes, in_dim), jnp.float32)

    # simple bidirectional ring graphs
    i = jnp.arange(num_nodes, dtype=jnp.int32)
    j = (i + 1) % num_nodes
    tg_edge_index = jnp.stack([jnp.concatenate([i, j]),
                               jnp.concatenate([j, i])], axis=0)
    # vision graph: ring + a couple of chords
    chords_s = jnp.array([0, 2], dtype=jnp.int32)
    chords_t = jnp.array([4, 6], dtype=jnp.int32)
    vg_edge_index = jnp.stack(
        [jnp.concatenate([i, j, chords_s, chords_t]),
         jnp.concatenate([j, i, chords_t, chords_s])], axis=0)

    params = init_params(kp, in_dim, hidden_dim, out_dim)

    loss = graph_contrastive_loss(tg_x, tg_edge_index, vg_x, vg_edge_index,
                                  params, temperature=0.1)
    loss = jax.block_until_ready(loss)
    assert jnp.isfinite(loss)
    print("KERNEL_OK")
</pallas_src>

<mosaic_0001>
module attributes {stable_mosaic.version = 11 : i64} {
  func.func @_feature_transform_kernel(%arg0: i32, %arg1: memref<256x128xbf16, #tpu.memory_space<vmem>>, %arg2: memref<128x128xbf16, #tpu.memory_space<vmem>>, %arg3: memref<256x1xf32, #tpu.memory_space<vmem>>, %arg4: memref<256x128xbf16, #tpu.memory_space<vmem>>) attributes {dimension_semantics = [#tpu.dimension_semantics<parallel>], iteration_bounds = array<i64: 4>, scalar_prefetch = 0 : i64, scratch_operands = 0 : i64, tpu.core_type = #tpu.core_type<tc>, window_params = [{transform_indices = @transform_0, window_bounds = array<i64: 256, 128>}, {pipeline_mode = #tpu.pipeline_mode<synchronous>, transform_indices = @transform_1, window_bounds = array<i64: 128, 128>}, {transform_indices = @transform_2, window_bounds = array<i64: 256, 1>}, {transform_indices = @transform_3, window_bounds = array<i64: 256, 128>}]} {
    %c0 = arith.constant 0 : index
    %c0_0 = arith.constant 0 : index
    %0 = vector.load %arg1[%c0, %c0_0] : memref<256x128xbf16, #tpu.memory_space<vmem>>, vector<256x128xbf16>
    %c0_1 = arith.constant 0 : index
    %c0_2 = arith.constant 0 : index
    %1 = vector.load %arg2[%c0_1, %c0_2] : memref<128x128xbf16, #tpu.memory_space<vmem>>, vector<128x128xbf16>
    %cst = arith.constant dense<0.000000e+00> : vector<256x128xf32>
    %2 = tpu.matmul %0, %1, %cst {dimension_numbers = #tpu.dot_dimension_numbers<[1], [0], [0], [1], [0, 0, 1, 1], [], []>} : vector<256x128xbf16>, vector<128x128xbf16>, vector<256x128xf32> -> vector<256x128xf32>
    %c0_3 = arith.constant 0 : index
    %c0_4 = arith.constant 0 : index
    %3 = vector.load %arg3[%c0_3, %c0_4] : memref<256x1xf32, #tpu.memory_space<vmem>>, vector<256x1xf32>
    %4 = vector.broadcast %3 : vector<256x1xf32> to vector<256x128xf32>
    %5 = arith.mulf %2, %4 : vector<256x128xf32>
    %6 = arith.truncf %5 : vector<256x128xf32> to vector<256x128xbf16>
    %c0_5 = arith.constant 0 : index
    %c0_6 = arith.constant 0 : index
    %7 = vector.load %arg4[%c0_5, %c0_6] : memref<256x128xbf16, #tpu.memory_space<vmem>>, vector<256x128xbf16>
    tpu.vector_store %arg4[%c0_5, %c0_6], %6 {strides = array<i32>} : memref<256x128xbf16, #tpu.memory_space<vmem>>, vector<256x128xbf16>,
    return
  }
  func.func @transform_0(%arg0: i32) -> (i32, i32) {
    %c0_i32 = arith.constant 0 : i32
    %c0_i32_0 = arith.constant 0 : i32
    return %arg0, %c0_i32 : i32, i32
  }
  func.func @transform_1(%arg0: i32) -> (i32, i32) {
    %c0_i32 = arith.constant 0 : i32
    %c0_i32_0 = arith.constant 0 : i32
    %c0_i32_1 = arith.constant 0 : i32
    return %c0_i32, %c0_i32_0 : i32, i32
  }
  func.func @transform_2(%arg0: i32) -> (i32, i32) {
    %c0_i32 = arith.constant 0 : i32
    %c0_i32_0 = arith.constant 0 : i32
    return %arg0, %c0_i32 : i32, i32
  }
  func.func @transform_3(%arg0: i32) -> (i32, i32) {
    %c0_i32 = arith.constant 0 : i32
    %c0_i32_0 = arith.constant 0 : i32
    return %arg0, %c0_i32 : i32, i32
  }
}

</mosaic_0001>

<llo_original>
// kernel: tpu_custom_call.1
$region0: #{tpu_custom_call.1}
  #allocation0 [shape = 'u32[]', space=smem, size = 0x4, offset = 0x4, fixed_abs, tag = 'smem constant byte address 0x4 - core index']
  #allocation1 [shape = 'u32[144,128]{1,0:T(1,128)}', space=vmem, size = 0x12000, scoped, tag = 'internal scratch']
  %s0 = inlined_call_operand.vmem [shape: bf16[1024,128], index: 0, kind: input, shape index: {}]
  %s1 = inlined_call_operand.vmem [shape: bf16[128,128], index: 1, kind: input, shape index: {}]
  %s2 = inlined_call_operand.vmem [shape: f32[1024,1], index: 2, kind: input, shape index: {}]
  %s3 = inlined_call_operand.hbm [shape: bf16[1024,128], index: 3, kind: output, shape index: {}]
  %s4 = sld [smem:[#allocation0]]
  $region45: #{tpu_custom_call.1} parent=0
    _
  %s6 = ssub.s32 1, %s4
  %s7 = scalar_select 0, %s6, %s4
  $region1: #{tpu_custom_call.1} parent=0
    #allocation2 [shape = 'u8[131072]{0}', space=vmem, size = 0x20000, scoped, tag = 'output window, operand 0']
    #allocation3 [shape = 's32[2]{0}', space=sflag, size = 0x8, scoped, tag = 'scoped memory for tpu_custom_call.1']
    %8 = vsyncpa [#allocation3], 0
    %s9 = scalar_lea.sflag [#allocation3], 1
    %10 = vsyncpa %s9, 0
    loop: start=0, step=1, limit=6
    $region2: #{tpu_custom_call.1} parent=1 // loop_pre_header
      _
    $region3: #{tpu_custom_call.1} parent=1 // loop_header
      %s12 = sphi 0, %s16
      %p13 = scmp.ge.s32.totalorder %s12, 6
      %s22 = sphi 0, %s24
      %s25 = sphi 0, %s22
      %s26 = sphi 0, %s25
      %s42 = sphi 0, %s26
      %s46 = sphi 0, %s46
      %s48 = sphi 0, %s46
      %s49 = sphi 0, %s48
      %s63 = sphi 0, %s49
      %s69 = sphi 0, %s71
      %s72 = sphi 0, %s69
      %s73 = sphi 0, %s72
      %s89 = sphi 0, %s73
      %s95 = sphi 0, %s97
      %s98 = sphi 0, %s95
      %s99 = sphi 0, %s98
      %s115 = sphi 0, %s99
    $region4: #{tpu_custom_call.1} parent=1 // loop_header_branch
      %15 = sbr.rel (%p13) target = $region8
    $region5: #{tpu_custom_call.1} parent=1 // loop_body
      %s17 = ssub.s32 %s12, 1
      %s18 = ssub.s32 %s12, 2
      %s19 = sadd.s32 %s12, 1
      %s20 = ssub.s32 %s12, %s19
      %p21 = scmp.eq.s32.totalorder %s20, 0
      %s23 = sadd.s32 %s22, 1
      %s24 = scalar_select %p21, %s22, %s23
      %p27 = pneg %p21
      %p28 = scmp.eq.s32.totalorder %s12, 3
      %p29 = por %p27, %p28
      %p30 = scmp.ne.s32.totalorder %s22, %s25
      %p31 = scmp.eq.s32.totalorder %s12, 0
      %p32 = por %p30, %p31
      %p33 = scmp.ne.s32.totalorder %s22, %s25
      %p34 = scmp.eq.s32.totalorder %s17, 3
      %p35 = por %p33, %p34
      %p36 = scmp.ne.s32.totalorder %s25, %s26
      %p37 = scmp.eq.s32.totalorder %s17, 0
      %p38 = por %p36, %p37
      %p39 = scmp.ne.s32.totalorder %s25, %s26
      %p40 = scmp.eq.s32.totalorder %s18, 3
      %p41 = por %p39, %p40
      %p43 = scmp.ne.s32.totalorder %s26, %s42
      %p44 = scmp.eq.s32.totalorder %s18, 0
      %p45 = por %p43, %p44
      %s47 = sadd.s32 %s46, 1
      %p50 = scmp.eq.s32.totalorder %s12, 3
      %p51 = scmp.ne.s32.totalorder %s46, %s48
      %p52 = scmp.eq.s32.totalorder %s12, 0
      %p53 = por %p51, %p52
      %p54 = scmp.ne.s32.totalorder %s46, %s48
      %p55 = scmp.eq.s32.totalorder %s17, 3
      %p56 = por %p54, %p55
      %p57 = scmp.ne.s32.totalorder %s48, %s49
      %p58 = scmp.eq.s32.totalorder %s17, 0
      %p59 = por %p57, %p58
      %p60 = scmp.ne.s32.totalorder %s48, %s49
      %p61 = scmp.eq.s32.totalorder %s18, 3
      %p62 = por %p60, %p61
      %p64 = scmp.ne.s32.totalorder %s49, %s63
      %p65 = scmp.eq.s32.totalorder %s18, 0
      %p66 = por %p64, %p65
      %s67 = ssub.s32 %s12, %s19
      %p68 = scmp.eq.s32.totalorder %s67, 0
      %s70 = sadd.s32 %s69, 1
      %s71 = scalar_select %p68, %s69, %s70
      %p74 = pneg %p68
      %p75 = scmp.eq.s32.totalorder %s12, 3
      %p76 = por %p74, %p75
      %p77 = scmp.ne.s32.totalorder %s69, %s72
      %p78 = scmp.eq.s32.totalorder %s12, 0
      %p79 = por %p77, %p78
      %p80 = scmp.ne.s32.totalorder %s69, %s72
      %p81 = scmp.eq.s32.totalorder %s17, 3
      %p82 = por %p80, %p81
      %p83 = scmp.ne.s32.totalorder %s72, %s73
      %p84 = scmp.eq.s32.totalorder %s17, 0
      %p85 = por %p83, %p84
      %p86 = scmp.ne.s32.totalorder %s72, %s73
      %p87 = scmp.eq.s32.totalorder %s18, 3
      %p88 = por %p86, %p87
      %p90 = scmp.ne.s32.totalorder %s73, %s89
      %p91 = scmp.eq.s32.totalorder %s18, 0
      %p92 = por %p90, %p91
      %s93 = ssub.s32 %s12, %s19
      %p94 = scmp.eq.s32.totalorder %s93, 0
      %s96 = sadd.s32 %s95, 1
      %s97 = scalar_select %p94, %s95, %s96
      %p100 = pneg %p94
      %p101 = scmp.eq.s32.totalorder %s12, 3
      %p102 = por %p100, %p101
      %p103 = scmp.ne.s32.totalorder %s95, %s98
      %p104 = scmp.eq.s32.totalorder %s12, 0
      %p105 = por %p103, %p104
      %p106 = scmp.ne.s32.totalorder %s95, %s98
      %p107 = scmp.eq.s32.totalorder %s17, 3
      %p108 = por %p106, %p107
      %p109 = scmp.ne.s32.totalorder %s98, %s99
      %p110 = scmp.eq.s32.totalorder %s17, 0
      %p111 = por %p109, %p110
      %p112 = scmp.ne.s32.totalorder %s98, %s99
      %p113 = scmp.eq.s32.totalorder %s18, 3
      %p114 = por %p112, %p113
      %p116 = scmp.ne.s32.totalorder %s99, %s115
      %p117 = scmp.eq.s32.totalorder %s18, 0
      %p118 = por %p116, %p117
      %p119 = scmp.le.s32.totalorder 1, %s12
      %p120 = scmp.lt.s32.totalorder %s12, 5
      %p121 = pnand %p119, %p120
      %p122 = pneg %p121
      // Predicated region
      $region9: #{tpu_custom_call.1} parent=5 // pred_check
        _
      $region10: #{tpu_custom_call.1} parent=5 // pred_check_branch
        %124 = sbr.rel (%p121) target = $region12
      $region11: #{tpu_custom_call.1} parent=5 // pred_region
        %s125 = ssub.s32 %s12, 1
        // Predicated region
        $region13: #{tpu_custom_call.1} parent=11 // pred_check
          %p126 = pneg %p59
        $region14: #{tpu_custom_call.1} parent=11 // pred_check_branch
          %128 = sbr.rel (%p126) target = $region16
        $region15: #{tpu_custom_call.1} parent=11 // pred_region
          _
        $region16: #{tpu_custom_call.1} parent=11 // pred_fallthru
          _
      $region12: #{tpu_custom_call.1} parent=5 // pred_fallthru
        _
      %p129 = scmp.lt.s32.totalorder %s12, 4
      // Predicated region
      $region17: #{tpu_custom_call.1} parent=5 // pred_check
        %p130 = pneg %p129
      $region18: #{tpu_custom_call.1} parent=5 // pred_check_branch
        %132 = sbr.rel (%p130) target = $region20
      $region19: #{tpu_custom_call.1} parent=5 // pred_region
        // Predicated region
        $region21: #{tpu_custom_call.1} parent=19 // pred_check
          %p133 = pneg %p32
        $region22: #{tpu_custom_call.1} parent=19 // pred_check_branch
          %135 = sbr.rel (%p133) target = $region24
        $region23: #{tpu_custom_call.1} parent=19 // pred_region
          %s136 = smul.u32 32, %s12
          %p137 = scmp.lt.s32.totalorder %s136, 127
          %s138 = scalar_select %p137, %s136, 127
          %s139 = smul.addr %s138, 4
          %s140 = scalar_lea.vmem %s0, %s139
          %s141 = smul.u32 32, %s12
        $region24: #{tpu_custom_call.1} parent=19 // pred_fallthru
          _
        // Predicated region
        $region25: #{tpu_custom_call.1} parent=19 // pred_check
          %p142 = pneg %p79
        $region26: #{tpu_custom_call.1} parent=19 // pred_check_branch
          %144 = sbr.rel (%p142) target = $region28
        $region27: #{tpu_custom_call.1} parent=19 // pred_region
          %s145 = smul.u32 32, %s12
          %p146 = scmp.lt.s32.totalorder %s145, 127
          %s147 = scalar_select %p146, %s145, 127
          %s148 = smul.addr %s147, 8
          %s149 = scalar_lea.vmem %s2, %s148
          %s150 = smul.u32 32, %s12
        $region28: #{tpu_custom_call.1} parent=19 // pred_fallthru
          _
      $region20: #{tpu_custom_call.1} parent=5 // pred_fallthru
        _
      %p151 = scmp.le.s32.totalorder 1, %s12
      %p152 = scmp.lt.s32.totalorder %s12, 5
      %p153 = pnand %p151, %p152
      %p154 = pneg %p153
      // Predicated region
      $region29: #{tpu_custom_call.1} parent=5 // pred_check
        _
      $region30: #{tpu_custom_call.1} parent=5 // pred_check_branch
        %156 = sbr.rel (%p153) target = $region32
      $region31: #{tpu_custom_call.1} parent=5 // pred_region
        %s157 = ssub.s32 %s12, 1
        %s158 = smul.u32 32, %s17
        %p159 = scmp.lt.s32.totalorder %s158, 127
        %s160 = scalar_select %p159, %s158, 127
        %s161 = smul.addr %s160, 4
        %s162 = scalar_lea.vmem %s0, %s161
        %p163 = pneg %p38
        %p164 = pneg %p35
        %p165 = pneg %p59
        %p166 = pneg %p56
        %s167 = smul.u32 32, %s17
        %p168 = scmp.lt.s32.totalorder %s167, 127
        %s169 = scalar_select %p168, %s167, 127
        %s170 = smul.addr %s169, 8
        %s171 = scalar_lea.vmem %s2, %s170
        %p172 = pneg %p85
        %p173 = pneg %p82
        %p174 = pneg %p111
        %p175 = pneg %p108
        %s176 = sand.u32 %s98, 1
        %s177 = scalar_lea.sflag [#allocation3], %s176
        %s178 = sand.u32 %s98, 1
        %s179 = smul.addr %s178, 128
        %s180 = scalar_lea.vmem [#allocation2], %s179
        %s181 = smul.u32 32, %s17
        %p182 = scmp.lt.s32.totalorder %s181, 127
        %s183 = scalar_select %p182, %s181, 127
        %s184 = smul.addr %s183, 4
        %s185 = scalar_lea.vmem %s0, %s184
        %s186 = smul.u32 32, %s17
        %s187 = smul.u32 32, %s17
        %p188 = scmp.lt.s32.totalorder %s187, 127
        %s189 = scalar_select %p188, %s187, 127
        %s190 = smul.addr %s189, 8
        %s191 = scalar_lea.vmem %s2, %s190
        %s192 = smul.u32 32, %s17
        %s193 = smul.u32 32, %s17
        %v195 = vld [vmem:[%s185] sm:$0xf]
        %v196 = vld [vmem:[%s185 + $0x4] sm:$0xf]
        %v197 = vld [vmem:[%s185 + $0x8] sm:$0xf]
        %v198 = vld [vmem:[%s185 + $0xc] sm:$0xf]
        %v199 = vld [vmem:[%s185 + $0x10] sm:$0xf]
        %v200 = vld [vmem:[%s185 + $0x14] sm:$0xf]
        %v201 = vld [vmem:[%s185 + $0x18] sm:$0xf]
        %v202 = vld [vmem:[%s185 + $0x1c] sm:$0xf]
        %v203 = vld [vmem:[%s185 + $0x20] sm:$0xf]
        %v204 = vld [vmem:[%s185 + $0x24] sm:$0xf]
        %v205 = vld [vmem:[%s185 + $0x28] sm:$0xf]
        %v206 = vld [vmem:[%s185 + $0x2c] sm:$0xf]
        %v207 = vld [vmem:[%s185 + $0x30] sm:$0xf]
        %v208 = vld [vmem:[%s185 + $0x34] sm:$0xf]
        %v209 = vld [vmem:[%s185 + $0x38] sm:$0xf]
        %v210 = vld [vmem:[%s185 + $0x3c] sm:$0xf]
        %v211 = vld [vmem:[%s185 + $0x40] sm:$0xf]
        %v212 = vld [vmem:[%s185 + $0x44] sm:$0xf]
        %v213 = vld [vmem:[%s185 + $0x48] sm:$0xf]
        %v214 = vld [vmem:[%s185 + $0x4c] sm:$0xf]
        %v215 = vld [vmem:[%s185 + $0x50] sm:$0xf]
        %v216 = vld [vmem:[%s185 + $0x54] sm:$0xf]
        %v217 = vld [vmem:[%s185 + $0x58] sm:$0xf]
        %v218 = vld [vmem:[%s185 + $0x5c] sm:$0xf]
        %v219 = vld [vmem:[%s185 + $0x60] sm:$0xf]
        %v220 = vld [vmem:[%s185 + $0x64] sm:$0xf]
        %v221 = vld [vmem:[%s185 + $0x68] sm:$0xf]
        %v222 = vld [vmem:[%s185 + $0x6c] sm:$0xf]
        %v223 = vld [vmem:[%s185 + $0x70] sm:$0xf]
        %v224 = vld [vmem:[%s185 + $0x74] sm:$0xf]
        %v225 = vld [vmem:[%s185 + $0x78] sm:$0xf]
        %v226 = vld [vmem:[%s185 + $0x7c] sm:$0xf]
        %v227 = vld [vmem:[%s1] sm:$0xf]
        %v228 = vld [vmem:[%s1 + $0x4] sm:$0xf]
        %v229 = vld [vmem:[%s1 + $0x8] sm:$0xf]
        %v230 = vld [vmem:[%s1 + $0xc] sm:$0xf]
        %v231 = vld [vmem:[%s1 + $0x10] sm:$0xf]
        %v232 = vld [vmem:[%s1 + $0x14] sm:$0xf]
        %v233 = vld [vmem:[%s1 + $0x18] sm:$0xf]
        %v234 = vld [vmem:[%s1 + $0x1c] sm:$0xf]
        %v235 = vld [vmem:[%s1 + $0x20] sm:$0xf]
        %v236 = vld [vmem:[%s1 + $0x24] sm:$0xf]
        %v237 = vld [vmem:[%s1 + $0x28] sm:$0xf]
        %v238 = vld [vmem:[%s1 + $0x2c] sm:$0xf]
        %v239 = vld [vmem:[%s1 + $0x30] sm:$0xf]
        %v240 = vld [vmem:[%s1 + $0x34] sm:$0xf]
        %v241 = vld [vmem:[%s1 + $0x38] sm:$0xf]
        %v242 = vld [vmem:[%s1 + $0x3c] sm:$0xf]
        %v275 = vunpack.c.l.b16 %v195
        %v276 = vunpack.c.l.b16 %v196
        %v277 = vunpack.c.l.b16 %v197
        %v278 = vunpack.c.l.b16 %v198
        %v279 = vunpack.c.l.b16 %v199
        %v280 = vunpack.c.l.b16 %v200
        %v281 = vunpack.c.l.b16 %v201
        %v282 = vunpack.c.l.b16 %v202
        %v283 = vunpack.c.l.b16 %v203
        %v284 = vunpack.c.l.b16 %v204
        %v285 = vunpack.c.l.b16 %v205
        %v286 = vunpack.c.l.b16 %v206
        %v287 = vunpack.c.l.b16 %v207
        %v288 = vunpack.c.l.b16 %v208
        %v289 = vunpack.c.l.b16 %v209
        %v290 = vunpack.c.l.b16 %v210
        %v291 = vunpack.c.l.b16 %v211
        %v292 = vunpack.c.l.b16 %v212
        %v293 = vunpack.c.l.b16 %v213
        %v294 = vunpack.c.l.b16 %v214
        %v295 = vunpack.c.l.b16 %v215
        %v296 = vunpack.c.l.b16 %v216
        %v297 = vunpack.c.l.b16 %v217
        %v298 = vunpack.c.l.b16 %v218
        %v299 = vunpack.c.l.b16 %v219
        %v300 = vunpack.c.l.b16 %v220
        %v301 = vunpack.c.l.b16 %v221
        %v302 = vunpack.c.l.b16 %v222
        %v303 = vunpack.c.l.b16 %v223
        %v304 = vunpack.c.l.b16 %v224
        %v305 = vunpack.c.l.b16 %v225
        %v306 = vunpack.c.l.b16 %v226
        %v307 = vpack.c.b16 %v276, %v275
        %v308 = vpack.c.b16 %v278, %v277
        %v309 = vpack.c.b16 %v280, %v279
        %v310 = vpack.c.b16 %v282, %v281
        %v311 = vpack.c.b16 %v284, %v283
        %v312 = vpack.c.b16 %v286, %v285
        %v313 = vpack.c.b16 %v288, %v287
        %v314 = vpack.c.b16 %v290, %v289
        %v315 = vpack.c.b16 %v292, %v291
        %v316 = vpack.c.b16 %v294, %v293
        %v317 = vpack.c.b16 %v296, %v295
        %v318 = vpack.c.b16 %v298, %v297
        %v319 = vpack.c.b16 %v300, %v299
        %v320 = vpack.c.b16 %v302, %v301
        %v321 = vpack.c.b16 %v304, %v303
        %v322 = vpack.c.b16 %v306, %v305
        %v355 = vunpack.c.l.b16 %v227
        %v356 = vunpack.c.l.b16 %v228
        %v357 = vunpack.c.l.b16 %v229
        %v358 = vunpack.c.l.b16 %v230
        %v359 = vunpack.c.l.b16 %v231
        %v360 = vunpack.c.l.b16 %v232
        %v361 = vunpack.c.l.b16 %v233
        %v362 = vunpack.c.l.b16 %v234
        %v363 = vunpack.c.l.b16 %v235
        %v364 = vunpack.c.l.b16 %v236
        %v365 = vunpack.c.l.b16 %v237
        %v366 = vunpack.c.l.b16 %v238
        %v367 = vunpack.c.l.b16 %v239
        %v368 = vunpack.c.l.b16 %v240
        %v369 = vunpack.c.l.b16 %v241
        %v370 = vunpack.c.l.b16 %v242
        %v371 = vpack.c.b16 %v356, %v355
        %v372 = vpack.c.b16 %v358, %v357
        %v373 = vpack.c.b16 %v360, %v359
        %v374 = vpack.c.b16 %v362, %v361
        %v375 = vpack.c.b16 %v364, %v363
        %v376 = vpack.c.b16 %v366, %v365
        %v377 = vpack.c.b16 %v368, %v367
        %v378 = vpack.c.b16 %v370, %v369
        %387 = vmatprep.subr.bf16.mxu0 0
        %388 = vmatpush1.bf16.msra.mxu0 %v371
        %389 = vmatprep.subr.bf16.mxu0 0
        %390 = vmatpush1.bf16.msra.mxu0 %v372
        %391 = vmatprep.subr.bf16.mxu0 0
        %392 = vmatpush1.bf16.msra.mxu0 %v373
        %393 = vmatprep.subr.bf16.mxu0 0
        %394 = vmatpush1.bf16.msra.mxu0 %v374
        %395 = vmatprep.subr.bf16.mxu0 0
        %396 = vmatpush1.bf16.msra.mxu0 %v375
        %397 = vmatprep.subr.bf16.mxu0 0
        %398 = vmatpush1.bf16.msra.mxu0 %v376
        %399 = vmatprep.subr.bf16.mxu0 0
        %400 = vmatpush1.bf16.msra.mxu0 %v377
        %401 = vmatprep.subr.bf16.mxu0 0
        %402 = vmatpush1.bf16.msra.mxu0 %v378
        %403 = vmatprep.subr.bf16.mxu0 0
        %404 = vmatpush1.bf16.msra.mxu0 0
        %405 = vmatprep.subr.bf16.mxu0 0
        %406 = vmatpush1.bf16.msra.mxu0 0
        %407 = vmatprep.subr.bf16.mxu0 0
        %408 = vmatpush1.bf16.msra.mxu0 0
        %409 = vmatprep.subr.bf16.mxu0 0
        %410 = vmatpush1.bf16.msra.mxu0 0
        %411 = vmatprep.subr.bf16.mxu0 0
        %412 = vmatpush1.bf16.msra.mxu0 0
        %413 = vmatprep.subr.bf16.mxu0 0
        %414 = vmatpush1.bf16.msra.mxu0 0
        %415 = vmatprep.subr.bf16.mxu0 0
        %416 = vmatpush1.bf16.msra.mxu0 0
        %417 = vmatprep.subr.bf16.mxu0 0
        %418 = vmatpush1.bf16.msra.mxu0 0
        %419 = vmatprep.mubr.bf16.mxu0 0
        %420 = vmatmul.mubr.bf16.gmra.mrb[0].mxu0 %v307
        %v421 = vpop.f32.mrb[0].mxu0
        %v422 = vadd.f32 0.0, %v421
        %v423 = vpop.f32.mrb[0].mxu0
        %v424 = vpop.f32.mrb[0].mxu0
        %v425 = vadd.f32 0.0, %v424
        %v426 = vpop.f32.mrb[0].mxu0
        %427 = vmatprep.mubr.bf16.mxu0 0
        %428 = vmatmul.mubr.bf16.gmra.mrb[0].mxu0 %v308
        %v429 = vpop.f32.mrb[0].mxu0
        %v430 = vadd.f32 0.0, %v429
        %v431 = vpop.f32.mrb[0].mxu0
        %v432 = vpop.f32.mrb[0].mxu0
        %v433 = vadd.f32 0.0, %v432
        %v434 = vpop.f32.mrb[0].mxu0
        %435 = vmatprep.mubr.bf16.mxu0 0
        %436 = vmatmul.mubr.bf16.gmra.mrb[0].mxu0 %v309
        %v437 = vpop.f32.mrb[0].mxu0
        %v438 = vadd.f32 0.0, %v437
        %v439 = vpop.f32.mrb[0].mxu0
        %v440 = vpop.f32.mrb[0].mxu0
        %v441 = vadd.f32 0.0, %v440
        %v442 = vpop.f32.mrb[0].mxu0
        %443 = vmatprep.mubr.bf16.mxu0 0
        %444 = vmatmul.mubr.bf16.gmra.mrb[0].mxu0 %v310
        %v445 = vpop.f32.mrb[0].mxu0
        %v446 = vadd.f32 0.0, %v445
        %v447 = vpop.f32.mrb[0].mxu0
        %v448 = vpop.f32.mrb[0].mxu0
        %v449 = vadd.f32 0.0, %v448
        %v450 = vpop.f32.mrb[0].mxu0
        %451 = vmatprep.mubr.bf16.mxu0 0
        %452 = vmatmul.mubr.bf16.gmra.mrb[0].mxu0 %v311
        %v453 = vpop.f32.mrb[0].mxu0
        %v454 = vadd.f32 0.0, %v453
        %v455 = vpop.f32.mrb[0].mxu0
        %v456 = vpop.f32.mrb[0].mxu0
        %v457 = vadd.f32 0.0, %v456
        %v458 = vpop.f32.mrb[0].mxu0
        %459 = vmatprep.mubr.bf16.mxu0 0
        %460 = vmatmul.mubr.bf16.gmra.mrb[0].mxu0 %v312
        %v461 = vpop.f32.mrb[0].mxu0
        %v462 = vadd.f32 0.0, %v461
        %v463 = vpop.f32.mrb[0].mxu0
        %v464 = vpop.f32.mrb[0].mxu0
        %v465 = vadd.f32 0.0, %v464
        %v466 = vpop.f32.mrb[0].mxu0
        %467 = vmatprep.mubr.bf16.mxu0 0
        %468 = vmatmul.mubr.bf16.gmra.mrb[0].mxu0 %v313
        %v469 = vpop.f32.mrb[0].mxu0
        %v470 = vadd.f32 0.0, %v469
        %v471 = vpop.f32.mrb[0].mxu0
        %v472 = vpop.f32.mrb[0].mxu0
        %v473 = vadd.f32 0.0, %v472
        %v474 = vpop.f32.mrb[0].mxu0
        %475 = vmatprep.mubr.bf16.mxu0 0
        %476 = vmatmul.mubr.bf16.gmra.mrb[0].mxu0 %v314
        %v477 = vpop.f32.mrb[0].mxu0
        %v478 = vadd.f32 0.0, %v477
        %v479 = vpop.f32.mrb[0].mxu0
        %v480 = vpop.f32.mrb[0].mxu0
        %v481 = vadd.f32 0.0, %v480
        %v482 = vpop.f32.mrb[0].mxu0
        %483 = vmatprep.mubr.bf16.mxu0 0
        %484 = vmatmul.mubr.bf16.gmra.mrb[0].mxu0 %v315
        %v485 = vpop.f32.mrb[0].mxu0
        %v486 = vadd.f32 0.0, %v485
        %v487 = vpop.f32.mrb[0].mxu0
        %v488 = vpop.f32.mrb[0].mxu0
        %v489 = vadd.f32 0.0, %v488
        %v490 = vpop.f32.mrb[0].mxu0
        %491 = vmatprep.mubr.bf16.mxu0 0
        %492 = vmatmul.mubr.bf16.gmra.mrb[0].mxu0 %v316
        %v493 = vpop.f32.mrb[0].mxu0
        %v494 = vadd.f32 0.0, %v493
        %v495 = vpop.f32.mrb[0].mxu0
        %v496 = vpop.f32.mrb[0].mxu0
        %v497 = vadd.f32 0.0, %v496
        %v498 = vpop.f32.mrb[0].mxu0
        %499 = vmatprep.mubr.bf16.mxu0 0
        %500 = vmatmul.mubr.bf16.gmra.mrb[0].mxu0 %v317
        %v501 = vpop.f32.mrb[0].mxu0
        %v502 = vadd.f32 0.0, %v501
        %v503 = vpop.f32.mrb[0].mxu0
        %v504 = vpop.f32.mrb[0].mxu0
        %v505 = vadd.f32 0.0, %v504
        %v506 = vpop.f32.mrb[0].mxu0
        %507 = vmatprep.mubr.bf16.mxu0 0
        %508 = vmatmul.mubr.bf16.gmra.mrb[0].mxu0 %v318
        %v509 = vpop.f32.mrb[0].mxu0
        %v510 = vadd.f32 0.0, %v509
        %v511 = vpop.f32.mrb[0].mxu0
        %v512 = vpop.f32.mrb[0].mxu0
        %v513 = vadd.f32 0.0, %v512
        %v514 = vpop.f32.mrb[0].mxu0
        %515 = vmatprep.mubr.bf16.mxu0 0
        %516 = vmatmul.mubr.bf16.gmra.mrb[0].mxu0 %v319
        %v517 = vpop.f32.mrb[0].mxu0
        %v518 = vadd.f32 0.0, %v517
        %v519 = vpop.f32.mrb[0].mxu0
        %v520 = vpop.f32.mrb[0].mxu0
        %v521 = vadd.f32 0.0, %v520
        %v522 = vpop.f32.mrb[0].mxu0
        %523 = vmatprep.mubr.bf16.mxu0 0
        %524 = vmatmul.mubr.bf16.gmra.mrb[0].mxu0 %v320
        %v525 = vpop.f32.mrb[0].mxu0
        %v526 = vadd.f32 0.0, %v525
        %v527 = vpop.f32.mrb[0].mxu0
        %v528 = vpop.f32.mrb[0].mxu0
        %v529 = vadd.f32 0.0, %v528
        %v530 = vpop.f32.mrb[0].mxu0
        %531 = vmatprep.mubr.bf16.mxu0 0
        %532 = vmatmul.mubr.bf16.gmra.mrb[0].mxu0 %v321
        %v533 = vpop.f32.mrb[0].mxu0
        %v534 = vadd.f32 0.0, %v533
        %v535 = vpop.f32.mrb[0].mxu0
        %v536 = vpop.f32.mrb[0].mxu0
        %v537 = vadd.f32 0.0, %v536
        %v538 = vpop.f32.mrb[0].mxu0
        %539 = vmatprep.mubr.bf16.mxu0 0
        %540 = vmatmul.mubr.bf16.gmra.mrb[0].mxu0 %v322
        %v541 = vpop.f32.mrb[0].mxu0
        %v542 = vadd.f32 0.0, %v541
        %v543 = vpop.f32.mrb[0].mxu0
        %v544 = vpop.f32.mrb[0].mxu0
        %v545 = vadd.f32 0.0, %v544
        %v546 = vpop.f32.mrb[0].mxu0
        %547 = vdwg.mxu0
        %v548 = vld [vmem:[%s191] sm:$0xff]
        %v549 = vld [vmem:[%s191 + $0x8] sm:$0xff]
        %v550 = vld [vmem:[%s191 + $0x10] sm:$0xff]
        %v551 = vld [vmem:[%s191 + $0x18] sm:$0xff]
        %v552 = vld [vmem:[%s191 + $0x20] sm:$0xff]
        %v553 = vld [vmem:[%s191 + $0x28] sm:$0xff]
        %v554 = vld [vmem:[%s191 + $0x30] sm:$0xff]
        %v555 = vld [vmem:[%s191 + $0x38] sm:$0xff]
        %v556 = vld [vmem:[%s191 + $0x40] sm:$0xff]
        %v557 = vld [vmem:[%s191 + $0x48] sm:$0xff]
        %v558 = vld [vmem:[%s191 + $0x50] sm:$0xff]
        %v559 = vld [vmem:[%s191 + $0x58] sm:$0xff]
        %v560 = vld [vmem:[%s191 + $0x60] sm:$0xff]
        %v561 = vld [vmem:[%s191 + $0x68] sm:$0xff]
        %v562 = vld [vmem:[%s191 + $0x70] sm:$0xff]
        %v563 = vld [vmem:[%s191 + $0x78] sm:$0xff]
        %v564 = vld [vmem:[%s191 + $0x80] sm:$0xff]
        %v565 = vld [vmem:[%s191 + $0x88] sm:$0xff]
        %v566 = vld [vmem:[%s191 + $0x90] sm:$0xff]
        %v567 = vld [vmem:[%s191 + $0x98] sm:$0xff]
        %v568 = vld [vmem:[%s191 + $0xa0] sm:$0xff]
        %v569 = vld [vmem:[%s191 + $0xa8] sm:$0xff]
        %v570 = vld [vmem:[%s191 + $0xb0] sm:$0xff]
        %v571 = vld [vmem:[%s191 + $0xb8] sm:$0xff]
        %v572 = vld [vmem:[%s191 + $0xc0] sm:$0xff]
        %v573 = vld [vmem:[%s191 + $0xc8] sm:$0xff]
        %v574 = vld [vmem:[%s191 + $0xd0] sm:$0xff]
        %v575 = vld [vmem:[%s191 + $0xd8] sm:$0xff]
        %v576 = vld [vmem:[%s191 + $0xe0] sm:$0xff]
        %v577 = vld [vmem:[%s191 + $0xe8] sm:$0xff]
        %v578 = vld [vmem:[%s191 + $0xf0] sm:$0xff]
        %v579 = vld [vmem:[%s191 + $0xf8] sm:$0xff]
        %581 = vset.pattern.permute.xlu0 0
        %582 = vperm.xlu0 %581, %v548
        %v583 = vpop.permute.xlu0 %582
        %586 = vset.pattern.permute.xlu0 0
        %587 = vperm.xlu0 %586, %v549
        %v588 = vpop.permute.xlu0 %587
        %591 = vset.pattern.permute.xlu0 0
        %592 = vperm.xlu0 %591, %v550
        %v593 = vpop.permute.xlu0 %592
        %596 = vset.pattern.permute.xlu0 0
        %597 = vperm.xlu0 %596, %v551
        %v598 = vpop.permute.xlu0 %597
        %601 = vset.pattern.permute.xlu0 0
        %602 = vperm.xlu0 %601, %v552
        %v603 = vpop.permute.xlu0 %602
        %606 = vset.pattern.permute.xlu0 0
        %607 = vperm.xlu0 %606, %v553
        %v608 = vpop.permute.xlu0 %607
        %611 = vset.pattern.permute.xlu0 0
        %612 = vperm.xlu0 %611, %v554
        %v613 = vpop.permute.xlu0 %612
        %616 = vset.pattern.permute.xlu0 0
        %617 = vperm.xlu0 %616, %v555
        %v618 = vpop.permute.xlu0 %617
        %621 = vset.pattern.permute.xlu0 0
        %622 = vperm.xlu0 %621, %v556
        %v623 = vpop.permute.xlu0 %622
        %626 = vset.pattern.permute.xlu0 0
        %627 = vperm.xlu0 %626, %v557
        %v628 = vpop.permute.xlu0 %627
        %631 = vset.pattern.permute.xlu0 0
        %632 = vperm.xlu0 %631, %v558
        %v633 = vpop.permute.xlu0 %632
        %636 = vset.pattern.permute.xlu0 0
        %637 = vperm.xlu0 %636, %v559
        %v638 = vpop.permute.xlu0 %637
        %641 = vset.pattern.permute.xlu0 0
        %642 = vperm.xlu0 %641, %v560
        %v643 = vpop.permute.xlu0 %642
        %646 = vset.pattern.permute.xlu0 0
        %647 = vperm.xlu0 %646, %v561
        %v648 = vpop.permute.xlu0 %647
        %651 = vset.pattern.permute.xlu0 0
        %652 = vperm.xlu0 %651, %v562
        %v653 = vpop.permute.xlu0 %652
        %656 = vset.pattern.permute.xlu0 0
        %657 = vperm.xlu0 %656, %v563
        %v658 = vpop.permute.xlu0 %657
        %661 = vset.pattern.permute.xlu0 0
        %662 = vperm.xlu0 %661, %v564
        %v663 = vpop.permute.xlu0 %662
        %666 = vset.pattern.permute.xlu0 0
        %667 = vperm.xlu0 %666, %v565
        %v668 = vpop.permute.xlu0 %667
        %671 = vset.pattern.permute.xlu0 0
        %672 = vperm.xlu0 %671, %v566
        %v673 = vpop.permute.xlu0 %672
        %676 = vset.pattern.permute.xlu0 0
        %677 = vperm.xlu0 %676, %v567
        %v678 = vpop.permute.xlu0 %677
        %681 = vset.pattern.permute.xlu0 0
        %682 = vperm.xlu0 %681, %v568
        %v683 = vpop.permute.xlu0 %682
        %686 = vset.pattern.permute.xlu0 0
        %687 = vperm.xlu0 %686, %v569
        %v688 = vpop.permute.xlu0 %687
        %691 = vset.pattern.permute.xlu0 0
        %692 = vperm.xlu0 %691, %v570
        %v693 = vpop.permute.xlu0 %692
        %696 = vset.pattern.permute.xlu0 0
        %697 = vperm.xlu0 %696, %v571
        %v698 = vpop.permute.xlu0 %697
        %701 = vset.pattern.permute.xlu0 0
        %702 = vperm.xlu0 %701, %v572
        %v703 = vpop.permute.xlu0 %702
        %706 = vset.pattern.permute.xlu0 0
        %707 = vperm.xlu0 %706, %v573
        %v708 = vpop.permute.xlu0 %707
        %711 = vset.pattern.permute.xlu0 0
        %712 = vperm.xlu0 %711, %v574
        %v713 = vpop.permute.xlu0 %712
        %716 = vset.pattern.permute.xlu0 0
        %717 = vperm.xlu0 %716, %v575
        %v718 = vpop.permute.xlu0 %717
        %721 = vset.pattern.permute.xlu0 0
        %722 = vperm.xlu0 %721, %v576
        %v723 = vpop.permute.xlu0 %722
        %726 = vset.pattern.permute.xlu0 0
        %727 = vperm.xlu0 %726, %v577
        %v728 = vpop.permute.xlu0 %727
        %731 = vset.pattern.permute.xlu0 0
        %732 = vperm.xlu0 %731, %v578
        %v733 = vpop.permute.xlu0 %732
        %736 = vset.pattern.permute.xlu0 0
        %737 = vperm.xlu0 %736, %v579
        %v738 = vpop.permute.xlu0 %737
        %v740 = vmul.f32 %v422, %v583
        %v741 = vmul.f32 %v425, %v588
        %v742 = vmul.f32 %v430, %v593
        %v743 = vmul.f32 %v433, %v598
        %v744 = vmul.f32 %v438, %v603
        %v745 = vmul.f32 %v441, %v608
        %v746 = vmul.f32 %v446, %v613
        %v747 = vmul.f32 %v449, %v618
        %v748 = vmul.f32 %v454, %v623
        %v749 = vmul.f32 %v457, %v628
        %v750 = vmul.f32 %v462, %v633
        %v751 = vmul.f32 %v465, %v638
        %v752 = vmul.f32 %v470, %v643
        %v753 = vmul.f32 %v473, %v648
        %v754 = vmul.f32 %v478, %v653
        %v755 = vmul.f32 %v481, %v658
        %v756 = vmul.f32 %v486, %v663
        %v757 = vmul.f32 %v489, %v668
        %v758 = vmul.f32 %v494, %v673
        %v759 = vmul.f32 %v497, %v678
        %v760 = vmul.f32 %v502, %v683
        %v761 = vmul.f32 %v505, %v688
        %v762 = vmul.f32 %v510, %v693
        %v763 = vmul.f32 %v513, %v698
        %v764 = vmul.f32 %v518, %v703
        %v765 = vmul.f32 %v521, %v708
        %v766 = vmul.f32 %v526, %v713
        %v767 = vmul.f32 %v529, %v718
        %v768 = vmul.f32 %v534, %v723
        %v769 = vmul.f32 %v537, %v728
        %v770 = vmul.f32 %v542, %v733
        %v771 = vmul.f32 %v545, %v738
        %v772 = vpack.c.bf16 %v741, %v740
        %v773 = vpack.c.bf16 %v743, %v742
        %v774 = vpack.c.bf16 %v745, %v744
        %v775 = vpack.c.bf16 %v747, %v746
        %v776 = vpack.c.bf16 %v749, %v748
        %v777 = vpack.c.bf16 %v751, %v750
        %v778 = vpack.c.bf16 %v753, %v752
        %v779 = vpack.c.bf16 %v755, %v754
        %v780 = vpack.c.bf16 %v757, %v756
        %v781 = vpack.c.bf16 %v759, %v758
        %v782 = vpack.c.bf16 %v761, %v760
        %v783 = vpack.c.bf16 %v763, %v762
        %v784 = vpack.c.bf16 %v765, %v764
        %v785 = vpack.c.bf16 %v767, %v766
        %v786 = vpack.c.bf16 %v769, %v768
        %v787 = vpack.c.bf16 %v771, %v770
        %v804 = vunpack.c.l.b16 %v772
        %v805 = vunpack.c.h.b16 %v772
        %v806 = vunpack.c.l.b16 %v773
        %v807 = vunpack.c.h.b16 %v773
        %v808 = vunpack.c.l.b16 %v774
        %v809 = vunpack.c.h.b16 %v774
        %v810 = vunpack.c.l.b16 %v775
        %v811 = vunpack.c.h.b16 %v775
        %v812 = vunpack.c.l.b16 %v776
        %v813 = vunpack.c.h.b16 %v776
        %v814 = vunpack.c.l.b16 %v777
        %v815 = vunpack.c.h.b16 %v777
        %v816 = vunpack.c.l.b16 %v778
        %v817 = vunpack.c.h.b16 %v778
        %v818 = vunpack.c.l.b16 %v779
        %v819 = vunpack.c.h.b16 %v779
        %v820 = vunpack.c.l.b16 %v780
        %v821 = vunpack.c.h.b16 %v780
        %v822 = vunpack.c.l.b16 %v781
        %v823 = vunpack.c.h.b16 %v781
        %v824 = vunpack.c.l.b16 %v782
        %v825 = vunpack.c.h.b16 %v782
        %v826 = vunpack.c.l.b16 %v783
        %v827 = vunpack.c.h.b16 %v783
        %v828 = vunpack.c.l.b16 %v784
        %v829 = vunpack.c.h.b16 %v784
        %v830 = vunpack.c.l.b16 %v785
        %v831 = vunpack.c.h.b16 %v785
        %v832 = vunpack.c.l.b16 %v786
        %v833 = vunpack.c.h.b16 %v786
        %v834 = vunpack.c.l.b16 %v787
        %v835 = vunpack.c.h.b16 %v787
        %v836 = vpack.c.b16 %v804, %v804
        %v837 = vpack.c.b16 %v805, %v805
        %v838 = vpack.c.b16 %v806, %v806
        %v839 = vpack.c.b16 %v807, %v807
        %v840 = vpack.c.b16 %v808, %v808
        %v841 = vpack.c.b16 %v809, %v809
        %v842 = vpack.c.b16 %v810, %v810
        %v843 = vpack.c.b16 %v811, %v811
        %v844 = vpack.c.b16 %v812, %v812
        %v845 = vpack.c.b16 %v813, %v813
        %v846 = vpack.c.b16 %v814, %v814
        %v847 = vpack.c.b16 %v815, %v815
        %v848 = vpack.c.b16 %v816, %v816
        %v849 = vpack.c.b16 %v817, %v817
        %v850 = vpack.c.b16 %v818, %v818
        %v851 = vpack.c.b16 %v819, %v819
        %v852 = vpack.c.b16 %v820, %v820
        %v853 = vpack.c.b16 %v821, %v821
        %v854 = vpack.c.b16 %v822, %v822
        %v855 = vpack.c.b16 %v823, %v823
        %v856 = vpack.c.b16 %v824, %v824
        %v857 = vpack.c.b16 %v825, %v825
        %v858 = vpack.c.b16 %v826, %v826
        %v859 = vpack.c.b16 %v827, %v827
        %v860 = vpack.c.b16 %v828, %v828
        %v861 = vpack.c.b16 %v829, %v829
        %v862 = vpack.c.b16 %v830, %v830
        %v863 = vpack.c.b16 %v831, %v831
        %v864 = vpack.c.b16 %v832, %v832
        %v865 = vpack.c.b16 %v833, %v833
        %v866 = vpack.c.b16 %v834, %v834
        %v867 = vpack.c.b16 %v835, %v835
        %900 = vst [vmem:[%s180] sm:$0xf] %v836
        %901 = vst [vmem:[%s180 + $0x4] sm:$0xf] %v837
        %902 = vst [vmem:[%s180 + $0x8] sm:$0xf] %v838
        %903 = vst [vmem:[%s180 + $0xc] sm:$0xf] %v839
        %904 = vst [vmem:[%s180 + $0x10] sm:$0xf] %v840
        %905 = vst [vmem:[%s180 + $0x14] sm:$0xf] %v841
        %906 = vst [vmem:[%s180 + $0x18] sm:$0xf] %v842
        %907 = vst [vmem:[%s180 + $0x1c] sm:$0xf] %v843
        %908 = vst [vmem:[%s180 + $0x20] sm:$0xf] %v844
        %909 = vst [vmem:[%s180 + $0x24] sm:$0xf] %v845
        %910 = vst [vmem:[%s180 + $0x28] sm:$0xf] %v846
        %911 = vst [vmem:[%s180 + $0x2c] sm:$0xf] %v847
        %912 = vst [vmem:[%s180 + $0x30] sm:$0xf] %v848
        %913 = vst [vmem:[%s180 + $0x34] sm:$0xf] %v849
        %914 = vst [vmem:[%s180 + $0x38] sm:$0xf] %v850
        %915 = vst [vmem:[%s180 + $0x3c] sm:$0xf] %v851
        %916 = vst [vmem:[%s180 + $0x40] sm:$0xf] %v852
        %917 = vst [vmem:[%s180 + $0x44] sm:$0xf] %v853
        %918 = vst [vmem:[%s180 + $0x48] sm:$0xf] %v854
        %919 = vst [vmem:[%s180 + $0x4c] sm:$0xf] %v855
        %920 = vst [vmem:[%s180 + $0x50] sm:$0xf] %v856
        %921 = vst [vmem:[%s180 + $0x54] sm:$0xf] %v857
        %922 = vst [vmem:[%s180 + $0x58] sm:$0xf] %v858
        %923 = vst [vmem:[%s180 + $0x5c] sm:$0xf] %v859
        %924 = vst [vmem:[%s180 + $0x60] sm:$0xf] %v860
        %925 = vst [vmem:[%s180 + $0x64] sm:$0xf] %v861
        %926 = vst [vmem:[%s180 + $0x68] sm:$0xf] %v862
        %927 = vst [vmem:[%s180 + $0x6c] sm:$0xf] %v863
        %928 = vst [vmem:[%s180 + $0x70] sm:$0xf] %v864
        %929 = vst [vmem:[%s180 + $0x74] sm:$0xf] %v865
        %930 = vst [vmem:[%s180 + $0x78] sm:$0xf] %v866
        %931 = vst [vmem:[%s180 + $0x7c] sm:$0xf] %v867
        %s932 = sand.u32 %s98, 1
        %s933 = scalar_lea.sflag [#allocation3], %s932
        %s934 = sand.u32 %s98, 1
        %s935 = smul.addr %s934, 128
        %s936 = scalar_lea.vmem [#allocation2], %s935
        // Predicated region
        $region33: #{tpu_custom_call.1} parent=31 // pred_check
          %p937 = pneg %p108
        $region34: #{tpu_custom_call.1} parent=31 // pred_check_branch
          %939 = sbr.rel (%p937) target = $region36
        $region35: #{tpu_custom_call.1} parent=31 // pred_region
          %s940 = smul.u32 32, %s17
          %s942 = ssub.s32 2048, 2048
          %943 = vsyncadd %s933, %s942
          %s944 = smul.addr %s940, 64
          %s945 = scalar_lea.hbm %s3, %s944
          %s946 = sshll.u32 %s936, 4
          %s947 = int_to_ptr.vmem [resolvable:$true] %s946
          %952 = dma.vmem_to_hbm [thread:$0]  %s947, 2048, %s945, %s933, 64, 64, 4
        $region36: #{tpu_custom_call.1} parent=31 // pred_fallthru
          _
      $region32: #{tpu_custom_call.1} parent=5 // pred_fallthru
        _
      %p953 = scmp.le.s32.totalorder 2, %s12
      // Predicated region
      $region37: #{tpu_custom_call.1} parent=5 // pred_check
        %p954 = pneg %p953
      $region38: #{tpu_custom_call.1} parent=5 // pred_check_branch
        %956 = sbr.rel (%p954) target = $region40
      $region39: #{tpu_custom_call.1} parent=5 // pred_region
        %s957 = ssub.s32 %s12, 2
        // Predicated region
        $region41: #{tpu_custom_call.1} parent=39 // pred_check
          %p958 = pneg %p114
        $region42: #{tpu_custom_call.1} parent=39 // pred_check_branch
          %960 = sbr.rel (%p958) target = $region44
        $region43: #{tpu_custom_call.1} parent=39 // pred_region
          %s961 = sand.u32 %s99, 1
          %s962 = scalar_lea.sflag [#allocation3], %s961
          %s963 = sand.u32 %s99, 1
          %s964 = smul.addr %s963, 128
          %s965 = scalar_lea.vmem [#allocation2], %s964
          %966 = dma.done %s962, 2048
        $region44: #{tpu_custom_call.1} parent=39 // pred_fallthru
          _
      $region40: #{tpu_custom_call.1} parent=5 // pred_fallthru
        _
    $region6: #{tpu_custom_call.1} parent=1 // loop_footer
      %s16 = sadd.s32 1, %s12
    $region7: #{tpu_custom_call.1} parent=1 // loop_footer_branch
      %11 = sbr.rel target = $region3
    $region8: #{tpu_custom_call.1} parent=1 // loop_exit
      _
    %967 = vsyncpa [#allocation3], 1
    %s968 = scalar_lea.sflag [#allocation3], 1
    %969 = vsyncpa %s968, 1

</llo_original>
